<compile_context>
chip_gen: v7x
topology: tpu7x:2x2x1
jax: 0.10.0
libtpu: 0.0.40
codegen_flags: <defaults>
</compile_context>

<pallas_src>
import functools

import jax
import jax.numpy as jnp
from jax.experimental import pallas as pl
from jax.experimental.pallas import tpu as pltpu

_MIB = 1024 * 1024


def _vmem_capacity_bytes():
    """Physical VMEM per TensorCore; conservative fallback if query fails."""
    try:
        return int(pltpu.get_tpu_info().vmem_capacity_bytes)
    except Exception:
        return 64 * _MIB  # v7x-sized (smallest of the supported generations)


def _budgets():
    cap = _vmem_capacity_bytes()
    if cap >= 96 * _MIB:
        # v5e / v6e: 128 MiB VMEM per core -> keep the single-read paths
        # usable for much larger slabs and allow bigger HW tiles.
        return dict(
            vmem_cap=int(min(104 * _MIB, cap - 8 * _MIB)),
            fused_ceiling=96 * _MIB,
            manual_ceiling=96 * _MIB,
            tile_budget=20 * _MIB,
        )
    # v7x: 64 MiB per TensorCore; leave headroom for internal scratch/semaphores.
    return dict(
        vmem_cap=int(min(50 * _MIB, max(cap - 8 * _MIB, 32 * _MIB))),
        fused_ceiling=44 * _MIB,
        manual_ceiling=44 * _MIB,
        tile_budget=12 * _MIB,
    )


# ----------------------------------------------------------------------------
# Path 1: fused single-pass kernel (auto-pipelined), one sample per grid step.
# ----------------------------------------------------------------------------
def _fused_se_kernel(x_ref, w1t_ref, w2_ref, o_ref, *, inv_hw):
    # x_ref  : (1, C, HW)  current batch element, input dtype
    # w1t_ref: (C, Cr)     fc1 weight, transposed (f32)
    # w2_ref : (C, Cr)     fc2 weight (f32)
    x = x_ref[0]                                                  # (C, HW)

    # Global average pool: lane reduction, f32 accumulation (no f32 copy of x).
    pooled = jnp.sum(x, axis=-1, keepdims=True,
                     dtype=jnp.float32) * inv_hw                  # (C, 1)

    # fc1 (C -> Cr), VPU: broadcast-mul + sublane reduce -> (1, Cr) row.
    h = jnp.maximum(jnp.sum(w1t_ref[...] * pooled, axis=0, keepdims=True), 0.0)
    # fc2 (Cr -> C), VPU: broadcast-mul + lane reduce -> (C, 1) column.
    gate = jax.nn.sigmoid(jnp.sum(w2_ref[...] * h, axis=-1, keepdims=True))

    # Channel-wise gating in the input dtype (broadcast over lanes).
    o_ref[0] = (x * gate.astype(x.dtype)).astype(o_ref.dtype)


def _se_fused(x2, w1t, w2, *, vmem_limit):
    N, C, HW = x2.shape
    Cr = w1t.shape[1]
    itemsize = jnp.dtype(x2.dtype).itemsize

    kernel = functools.partial(_fused_se_kernel, inv_hw=1.0 / HW)
    cost = pl.CostEstimate(
        flops=2 * N * C * HW + 4 * N * C * Cr,
        transcendentals=N * C,
        bytes_accessed=2 * N * C * HW * itemsize + 2 * C * Cr * 4,
    )
    return pl.pallas_call(
        kernel,
        out_shape=jax.ShapeDtypeStruct((N, C, HW), x2.dtype),
        grid=(N,),
        in_specs=[
            pl.BlockSpec((1, C, HW), lambda n: (n, 0, 0)),
            pl.BlockSpec((C, Cr), lambda n: (0, 0)),
            pl.BlockSpec((C, Cr), lambda n: (0, 0)),
        ],
        out_specs=pl.BlockSpec((1, C, HW), lambda n: (n, 0, 0)),
        compiler_params=pltpu.CompilerParams(
            dimension_semantics=("parallel",),
            vmem_limit_bytes=vmem_limit,
        ),
        cost_estimate=cost,
    )(x2, w1t, w2)


# ----------------------------------------------------------------------------
# Path 2: manually-DMA'd single-read fused kernel (one resident slab in VMEM).
# Used when the auto-pipelined path would need ~4x the slab but ~1x fits.
# ----------------------------------------------------------------------------
def _manual_se_kernel(x_hbm, w1t_ref, w2_ref, o_hbm, xbuf, sem, *, inv_hw):
    n = pl.program_id(0)

    cp_in = pltpu.make_async_copy(x_hbm.at[n], xbuf, sem)
    cp_in.start()
    cp_in.wait()

    x = xbuf[...]                                                 # (C, HW)
    pooled = jnp.sum(x, axis=-1, keepdims=True,
                     dtype=jnp.float32) * inv_hw                  # (C, 1)
    h = jnp.maximum(jnp.sum(w1t_ref[...] * pooled, axis=0, keepdims=True), 0.0)
    gate = jax.nn.sigmoid(jnp.sum(w2_ref[...] * h, axis=-1, keepdims=True))

    # Gate in place, then stream the slab back out.
    xbuf[...] = (x * gate.astype(x.dtype)).astype(xbuf.dtype)

    cp_out = pltpu.make_async_copy(xbuf, o_hbm.at[n], sem)
    cp_out.start()
    cp_out.wait()


def _se_manual(x2, w1t, w2, *, vmem_limit):
    N, C, HW = x2.shape
    Cr = w1t.shape[1]
    itemsize = jnp.dtype(x2.dtype).itemsize

    kernel = functools.partial(_manual_se_kernel, inv_hw=1.0 / HW)
    cost = pl.CostEstimate(
        flops=2 * N * C * HW + 4 * N * C * Cr,
        transcendentals=N * C,
        bytes_accessed=2 * N * C * HW * itemsize + 2 * C * Cr * 4,
    )
    return pl.pallas_call(
        kernel,
        out_shape=jax.ShapeDtypeStruct((N, C, HW), x2.dtype),
        grid=(N,),
        in_specs=[
            pl.BlockSpec(memory_space=pl.ANY),        # x stays in HBM
            pl.BlockSpec((C, Cr), lambda n: (0, 0)),  # fc1^T (f32)
            pl.BlockSpec((C, Cr), lambda n: (0, 0)),  # fc2   (f32)
        ],
        out_specs=pl.BlockSpec(memory_space=pl.ANY),
        scratch_shapes=[
            pltpu.VMEM((C, HW), x2.dtype),
            pltpu.SemaphoreType.DMA,
        ],
        compiler_params=pltpu.CompilerParams(
            dimension_semantics=("arbitrary",),
            vmem_limit_bytes=vmem_limit,
        ),
        cost_estimate=cost,
    )(x2, w1t, w2)


# ----------------------------------------------------------------------------
# Path 3: two-pass (HW-tiled) fallback: pool kernel -> XLA FCs -> gating kernel.
# Ragged last HW tile handled inside the kernels (no jnp.pad, no output slice).
# ----------------------------------------------------------------------------
def _pool_kernel(x_ref, sum_ref, *, hw_total, tile, ragged):
    # x_ref  : (1, C, T)   one spatial tile of one sample
    # sum_ref: (1, C, 1)   f32 accumulator, resident across the HW grid axis
    @pl.when(pl.program_id(1) == 0)
    def _():
        sum_ref[...] = jnp.zeros_like(sum_ref)

    x = x_ref[0]                                                  # (C, T)
    if ragged:
        # Last tile overruns HW: out-of-bounds lanes hold unspecified data,
        # mask them to 0 so the pooled sum is exact.
        remaining = hw_total - pl.program_id(1) * tile
        lane = jax.lax.broadcasted_iota(jnp.int32, x.shape, dimension=1)
        x = jnp.where(lane < remaining, x, 0)

    sum_ref[...] += jnp.sum(x, axis=-1, keepdims=True,
                            dtype=jnp.float32)[None]


def _gate_kernel(x_ref, g_ref, o_ref):
    # x_ref: (1, C, T); g_ref: (1, C, 1) f32; o_ref: (1, C, T)
    # Out-of-bounds lanes of a ragged last tile are dropped by Pallas'
    # partial-block masked store, so no explicit masking is needed here.
    x = x_ref[0]
    o_ref[0] = (x * g_ref[0].astype(x.dtype)).astype(o_ref.dtype)


def _choose_hw_tile(C, itemsize, hw, tile_budget):
    # ~4 live (C, T) buffers: double-buffered input tile + output tile.
    per_lane = max(1, 4 * C * itemsize)
    t = (tile_budget // per_lane) // 128 * 128
    t = max(128, int(t))
    if t >= hw:
        return int(hw)          # single full-extent tile, no raggedness
    return int(t)               # multiple of 128; last tile may be ragged


def _se_tiled(x2, w1, w2, *, budgets, hw_tile=None):
    N, C, HW = x2.shape
    itemsize = jnp.dtype(x2.dtype).itemsize

    if hw_tile is None:
        T = _choose_hw_tile(C, itemsize, HW, budgets["tile_budget"])
    else:
        T = int(min(hw_tile, HW))   # test/override knob
    nH = int(pl.cdiv(HW, T))
    ragged = (HW % T) != 0

    tile_bytes = C * T * itemsize
    vmem_limit = int(min(max(6 * tile_bytes + 8 * _MIB, 16 * _MIB),
                         budgets["vmem_cap"]))

    # Pass 1: per-channel spatial sums (reduction axis last, "arbitrary").
    pool_kernel = functools.partial(_pool_kernel, hw_total=HW, tile=T,
                                    ragged=ragged)
    pool_cost = pl.CostEstimate(
        flops=N * C * HW,
        transcendentals=0,
        bytes_accessed=N * C * HW * itemsize + N * C * 4,
    )
    sums = pl.pallas_call(
        pool_kernel,
        out_shape=jax.ShapeDtypeStruct((N, C, 1), jnp.float32),
        grid=(N, nH),
        in_specs=[pl.BlockSpec((1, C, T), lambda n, h: (n, 0, h))],
        out_specs=pl.BlockSpec((1, C, 1), lambda n, h: (n, 0, 0)),
        compiler_params=pltpu.CompilerParams(
            dimension_semantics=("parallel", "arbitrary"),
            vmem_limit_bytes=vmem_limit,
        ),
        cost_estimate=pool_cost,
    )(x2)

    # FCs as one real batched matmul in plain XLA (f32).
    pooled = sums[:, :, 0] * (1.0 / HW)                          # (N, C)
    hidden = jnp.maximum(pooled @ w1.T.astype(jnp.float32), 0.0)  # (N, Cr)
    gate = jax.nn.sigmoid(hidden @ w2.T.astype(jnp.float32))      # (N, C)
    gate3 = gate[:, :, None]                                      # (N, C, 1)

    # Pass 2: channel-wise gating, both grid axes parallel, lane-dense tiles
    # (except the ragged tail, which Pallas stores with a masked vst).
    gate_cost = pl.CostEstimate(
        flops=N * C * HW,
        transcendentals=0,
        bytes_accessed=2 * N * C * HW * itemsize + N * C * 4,
    )
    out = pl.pallas_call(
        _gate_kernel,
        out_shape=jax.ShapeDtypeStruct((N, C, HW), x2.dtype),
        grid=(N, nH),
        in_specs=[
            pl.BlockSpec((1, C, T), lambda n, h: (n, 0, h)),
            pl.BlockSpec((1, C, 1), lambda n, h: (n, 0, 0)),
        ],
        out_specs=pl.BlockSpec((1, C, T), lambda n, h: (n, 0, h)),
        compiler_params=pltpu.CompilerParams(
            dimension_semantics=("parallel", "parallel"),
            vmem_limit_bytes=vmem_limit,
        ),
        cost_estimate=gate_cost,
    )(x2, gate3)
    return out


# ----------------------------------------------------------------------------
# Public wrapper
# ----------------------------------------------------------------------------
def se_module(x, w1, w2, *, force_path=None, hw_tile=None):
    """SEModule forward. x: (N, C, H, W); w1: (Cr, C); w2: (C, Cr)."""
    N, C, H, W = x.shape
    Cr = w1.shape[0]
    HW = H * W
    itemsize = jnp.dtype(x.dtype).itemsize

    x2 = x.reshape(N, C, HW)
    budgets = _budgets()

    slab = C * HW * itemsize                  # one sample's (C, HW) slab
    weight_bytes = 2 * C * Cr * 4             # two (C, Cr) f32 weight tiles
    fc_temp = 2 * C * Cr * 4 + 8 * C * 4      # f32 FC products + small columns
    # Auto-pipelined fused: double-buffered in/out slabs + weights + temps.
    fused_need = 4 * slab + 2 * weight_bytes + fc_temp
    # Manual fused: one resident slab + weights + temps + headroom.
    manual_need = slab + 2 * weight_bytes + fc_temp + 2 * _MIB

    if force_path is None:
        if fused_need <= budgets["fused_ceiling"]:
            path = "fused"
        elif manual_need <= budgets["manual_ceiling"]:
            path = "manual"
        else:
            path = "tiled"
    else:
        path = force_path

    if path == "tiled":
        out = _se_tiled(x2, w1, w2, budgets=budgets, hw_tile=hw_tile)
    else:
        w1t = w1.T.astype(jnp.float32)        # (C, Cr)
        w2f = w2.astype(jnp.float32)          # (C, Cr)
        if path == "fused":
            vmem_limit = int(min(max(fused_need + 4 * _MIB, 16 * _MIB),
                                 budgets["vmem_cap"]))
            out = _se_fused(x2, w1t, w2f, vmem_limit=vmem_limit)
        else:
            vmem_limit = int(min(max(manual_need + 4 * _MIB, 16 * _MIB),
                                 budgets["vmem_cap"]))
            out = _se_manual(x2, w1t, w2f, vmem_limit=vmem_limit)
    return out.reshape(N, C, H, W)


def se_reference(x, w1, w2):
    pooled = jnp.mean(x, axis=(2, 3))                         # (N, C)
    h = jnp.maximum(pooled @ w1.T, 0.0)                       # (N, Cr)
    g = jax.nn.sigmoid(h @ w2.T)                              # (N, C)
    return x * g[:, :, None, None]


if __name__ == "__main__":
    key = jax.random.PRNGKey(0)
    kx, k1, k2, kx2 = jax.random.split(key, 4)

    # SEModule(channels=4, reduction=2) at a small NCHW shape.
    N, C, H, W = 2, 4, 16, 16
    reduction = 2
    Cr = C // reduction

    x = jax.random.normal(kx, (N, C, H, W), dtype=jnp.float32)
    # fc1: xavier_uniform init (1x1 conv, fan_in=C, fan_out=Cr), bias-free.
    bound1 = (6.0 / (C + Cr)) ** 0.5
    w1 = jax.random.uniform(k1, (Cr, C), minval=-bound1, maxval=bound1,
                            dtype=jnp.float32)
    bound2 = 1.0 / (Cr ** 0.5)
    w2 = jax.random.uniform(k2, (C, Cr), minval=-bound2, maxval=bound2,
                            dtype=jnp.float32)

    ref = jax.block_until_ready(se_reference(x, w1, w2))

    # Default path (fused, auto-pipelined).
    out_fused = jax.block_until_ready(se_module(x, w1, w2))
    assert out_fused.shape == (N, C, H, W)
    assert jnp.allclose(out_fused, ref, rtol=1e-5, atol=1e-5), \
        "fused kernel mismatch vs reference"

    # Manually-DMA'd single-read fused path (used for big slabs); validated here.
    out_manual = jax.block_until_ready(se_module(x, w1, w2, force_path="manual"))
    assert jnp.allclose(out_manual, ref, rtol=1e-5, atol=1e-5), \
        "manual-DMA kernel mismatch vs reference"

    # Two-pass HW-tiled fallback; validated here.
    out_tiled = jax.block_until_ready(se_module(x, w1, w2, force_path="tiled"))
    assert jnp.allclose(out_tiled, ref, rtol=1e-5, atol=1e-5), \
        "tiled kernels mismatch vs reference"

    # Ragged spatial extent (HW = 225, not a multiple of 128) with a forced
    # 128-wide tile: exercises the in-kernel tail masking in the pool pass and
    # the partial-block masked stores in the gate pass.
    N2, C2, H2, W2 = 2, 8, 15, 15
    Cr2 = C2 // reduction
    x_r = jax.random.normal(kx2, (N2, C2, H2, W2), dtype=jnp.float32)
    w1_r = jax.random.uniform(k1, (Cr2, C2), minval=-0.5, maxval=0.5,
                              dtype=jnp.float32)
    w2_r = jax.random.uniform(k2, (C2, Cr2), minval=-0.5, maxval=0.5,
                              dtype=jnp.float32)
    ref_r = jax.block_until_ready(se_reference(x_r, w1_r, w2_r))
    out_r = jax.block_until_ready(
        se_module(x_r, w1_r, w2_r, force_path="tiled", hw_tile=128))
    assert jnp.allclose(out_r, ref_r, rtol=1e-5, atol=1e-5), \
        "ragged-tile tiled kernels mismatch vs reference"

    print("KERNEL_OK")
</pallas_src>

<mosaic_0001>
module attributes {stable_mosaic.version = 11 : i64} {
  func.func @_fused_se_kernel(%arg0: i32, %arg1: memref<1x4x256xf32, #tpu.memory_space<vmem>>, %arg2: memref<4x2xf32, #tpu.memory_space<vmem>>, %arg3: memref<4x2xf32, #tpu.memory_space<vmem>>, %arg4: memref<1x4x256xf32, #tpu.memory_space<vmem>>) attributes {dimension_semantics = [#tpu.dimension_semantics<parallel>], iteration_bounds = array<i64: 2>, scalar_prefetch = 0 : i64, scratch_operands = 0 : i64, tpu.core_type = #tpu.core_type<tc>, window_params = [{transform_indices = @transform_0, window_bounds = array<i64: 1, 4, 256>}, {pipeline_mode = #tpu.pipeline_mode<synchronous>, transform_indices = @transform_1, window_bounds = array<i64: 4, 2>}, {pipeline_mode = #tpu.pipeline_mode<synchronous>, transform_indices = @transform_2, window_bounds = array<i64: 4, 2>}, {transform_indices = @transform_3, window_bounds = array<i64: 1, 4, 256>}]} {
    %c0 = arith.constant 0 : index
    %c0_0 = arith.constant 0 : index
    %c0_1 = arith.constant 0 : index
    %0 = vector.load %arg1[%c0, %c0_0, %c0_1] : memref<1x4x256xf32, #tpu.memory_space<vmem>>, vector<1x4x256xf32>
    %1 = vector.shape_cast %0 : vector<1x4x256xf32> to vector<4x256xf32>
    %cst = arith.constant dense<0.000000e+00> : vector<4xf32>
    %2 = vector.multi_reduction <add>, %1, %cst [1] : vector<4x256xf32> to vector<4xf32>
    %3 = vector.shape_cast %2 : vector<4xf32> to vector<4x1xf32>
    %cst_2 = arith.constant 3.906250e-03 : f32
    %4 = vector.broadcast %cst_2 : f32 to vector<4x1xf32>
    %5 = arith.mulf %3, %4 : vector<4x1xf32>
    %c0_3 = arith.constant 0 : index
    %c0_4 = arith.constant 0 : index
    %6 = vector.load %arg2[%c0_3, %c0_4] : memref<4x2xf32, #tpu.memory_space<vmem>>, vector<4x2xf32>
    %7 = vector.broadcast %5 : vector<4x1xf32> to vector<4x2xf32>
    %8 = arith.mulf %6, %7 : vector<4x2xf32>
    %cst_5 = arith.constant dense<0.000000e+00> : vector<2xf32>
    %9 = vector.multi_reduction <add>, %8, %cst_5 [0] : vector<4x2xf32> to vector<2xf32>
    %10 = vector.shape_cast %9 : vector<2xf32> to vector<1x2xf32>
    %cst_6 = arith.constant 0.000000e+00 : f32
    %11 = vector.broadcast %cst_6 : f32 to vector<1x2xf32>
    %12 = arith.maximumf %10, %11 : vector<1x2xf32>
    %c0_7 = arith.constant 0 : index
    %c0_8 = arith.constant 0 : index
    %13 = vector.load %arg3[%c0_7, %c0_8] : memref<4x2xf32, #tpu.memory_space<vmem>>, vector<4x2xf32>
    %14 = vector.broadcast %12 : vector<1x2xf32> to vector<4x2xf32>
    %15 = arith.mulf %13, %14 : vector<4x2xf32>
    %cst_9 = arith.constant dense<0.000000e+00> : vector<4xf32>
    %16 = vector.multi_reduction <add>, %15, %cst_9 [1] : vector<4x2xf32> to vector<4xf32>
    %17 = vector.shape_cast %16 : vector<4xf32> to vector<4x1xf32>
    %18 = arith.negf %17 : vector<4x1xf32>
    %19 = math.exp %18 : vector<4x1xf32>
    %cst_10 = arith.constant 1.000000e+00 : f32
    %20 = vector.broadcast %cst_10 : f32 to vector<4x1xf32>
    %21 = arith.addf %20, %19 : vector<4x1xf32>
    %22 = arith.divf %20, %21 : vector<4x1xf32>
    %23 = vector.broadcast %22 : vector<4x1xf32> to vector<4x256xf32>
    %24 = arith.mulf %1, %23 : vector<4x256xf32>
    %c0_11 = arith.constant 0 : index
    %c0_12 = arith.constant 0 : index
    %c0_13 = arith.constant 0 : index
    %25 = vector.load %arg4[%c0_11, %c0_12, %c0_13] : memref<1x4x256xf32, #tpu.memory_space<vmem>>, vector<1x4x256xf32>
    %26 = vector.shape_cast %25 : vector<1x4x256xf32> to vector<4x256xf32>
    %27 = vector.shape_cast %24 : vector<4x256xf32> to vector<1x4x256xf32>
    tpu.vector_store %arg4[%c0_11, %c0_12, %c0_13], %27 {strides = array<i32>} : memref<1x4x256xf32, #tpu.memory_space<vmem>>, vector<1x4x256xf32>,
    return
  }
  func.func @transform_0(%arg0: i32) -> (i32, i32, i32) {
    %c0_i32 = arith.constant 0 : i32
    %c0_i32_0 = arith.constant 0 : i32
    %c0_i32_1 = arith.constant 0 : i32
    return %arg0, %c0_i32, %c0_i32_0 : i32, i32, i32
  }
  func.func @transform_1(%arg0: i32) -> (i32, i32) {
    %c0_i32 = arith.constant 0 : i32
    %c0_i32_0 = arith.constant 0 : i32
    %c0_i32_1 = arith.constant 0 : i32
    return %c0_i32, %c0_i32_0 : i32, i32
  }
  func.func @transform_2(%arg0: i32) -> (i32, i32) {
    %c0_i32 = arith.constant 0 : i32
    %c0_i32_0 = arith.constant 0 : i32
    %c0_i32_1 = arith.constant 0 : i32
    return %c0_i32, %c0_i32_0 : i32, i32
  }
  func.func @transform_3(%arg0: i32) -> (i32, i32, i32) {
    %c0_i32 = arith.constant 0 : i32
    %c0_i32_0 = arith.constant 0 : i32
    %c0_i32_1 = arith.constant 0 : i32
    return %arg0, %c0_i32, %c0_i32_0 : i32, i32, i32
  }
}

</mosaic_0001>

<llo_original>
// kernel: tpu_custom_call.1
$region0: #{tpu_custom_call.1}
  #allocation0 [shape = 'u32[]', space=smem, size = 0x4, offset = 0x4, fixed_abs, tag = 'smem constant byte address 0x4 - core index']
  #allocation1 [shape = 'u32[144,128]{1,0:T(1,128)}', space=vmem, size = 0x12000, scoped, tag = 'internal scratch']
  %s0 = inlined_call_operand.hbm [shape: f32[2,4,256], index: 0, kind: input, shape index: {}]
  %s1 = inlined_call_operand.vmem [shape: f32[4,2], index: 1, kind: input, shape index: {}]
  %s2 = inlined_call_operand.vmem [shape: f32[4,2], index: 2, kind: input, shape index: {}]
  %s3 = inlined_call_operand.hbm [shape: f32[2,4,256], index: 3, kind: output, shape index: {}]
  %s4 = sld [smem:[#allocation0]]
  $region49: #{tpu_custom_call.1} parent=0
    _
  %s6 = ssub.s32 1, %s4
  %s7 = scalar_select 0, %s6, %s4
  $region1: #{tpu_custom_call.1} parent=0
    #allocation2 [shape = 'u8[8192]{0}', space=vmem, size = 0x2000, scoped, tag = 'input window, operand 0']
    #allocation3 [shape = 's32[2]{0}', space=sflag, size = 0x8, scoped, tag = 'scoped memory for tpu_custom_call.1']
    #allocation4 [shape = 's32[2]{0}', space=sflag, size = 0x8, scoped, tag = 'scoped memory for tpu_custom_call.1']
    #allocation5 [shape = 'u8[8192]{0}', space=vmem, size = 0x2000, scoped, tag = 'output window, operand 0']
    %8 = vsyncpa [#allocation3], 0
    %s9 = scalar_lea.sflag [#allocation3], 1
    %10 = vsyncpa %s9, 0
    %11 = vsyncpa [#allocation4], 0
    %s12 = scalar_lea.sflag [#allocation4], 1
    %13 = vsyncpa %s12, 0
    loop: start=0, step=1, limit=4
    $region2: #{tpu_custom_call.1} parent=1 // loop_pre_header
      _
    $region3: #{tpu_custom_call.1} parent=1 // loop_header
      %s15 = sphi 0, %s19
      %p16 = scmp.ge.s32.totalorder %s15, 4
      %s25 = sphi 0, %s27
      %s28 = sphi 0, %s25
      %s29 = sphi 0, %s28
      %s45 = sphi 0, %s29
      %s49 = sphi 0, %s49
      %s51 = sphi 0, %s49
      %s52 = sphi 0, %s51
      %s66 = sphi 0, %s52
      %s70 = sphi 0, %s70
      %s72 = sphi 0, %s70
      %s73 = sphi 0, %s72
      %s87 = sphi 0, %s73
      %s93 = sphi 0, %s95
      %s96 = sphi 0, %s93
      %s97 = sphi 0, %s96
      %s113 = sphi 0, %s97
    $region4: #{tpu_custom_call.1} parent=1 // loop_header_branch
      %18 = sbr.rel (%p16) target = $region8
    $region5: #{tpu_custom_call.1} parent=1 // loop_body
      %s20 = ssub.s32 %s15, 1
      %s21 = ssub.s32 %s15, 2
      %s22 = sadd.s32 %s15, 1
      %s23 = ssub.s32 %s15, %s22
      %p24 = scmp.eq.s32.totalorder %s23, 0
      %s26 = sadd.s32 %s25, 1
      %s27 = scalar_select %p24, %s25, %s26
      %p30 = pneg %p24
      %p31 = scmp.eq.s32.totalorder %s15, 1
      %p32 = por %p30, %p31
      %p33 = scmp.ne.s32.totalorder %s25, %s28
      %p34 = scmp.eq.s32.totalorder %s15, 0
      %p35 = por %p33, %p34
      %p36 = scmp.ne.s32.totalorder %s25, %s28
      %p37 = scmp.eq.s32.totalorder %s20, 1
      %p38 = por %p36, %p37
      %p39 = scmp.ne.s32.totalorder %s28, %s29
      %p40 = scmp.eq.s32.totalorder %s20, 0
      %p41 = por %p39, %p40
      %p42 = scmp.ne.s32.totalorder %s28, %s29
      %p43 = scmp.eq.s32.totalorder %s21, 1
      %p44 = por %p42, %p43
      %p46 = scmp.ne.s32.totalorder %s29, %s45
      %p47 = scmp.eq.s32.totalorder %s21, 0
      %p48 = por %p46, %p47
      %s50 = sadd.s32 %s49, 1
      %p53 = scmp.eq.s32.totalorder %s15, 1
      %p54 = scmp.ne.s32.totalorder %s49, %s51
      %p55 = scmp.eq.s32.totalorder %s15, 0
      %p56 = por %p54, %p55
      %p57 = scmp.ne.s32.totalorder %s49, %s51
      %p58 = scmp.eq.s32.totalorder %s20, 1
      %p59 = por %p57, %p58
      %p60 = scmp.ne.s32.totalorder %s51, %s52
      %p61 = scmp.eq.s32.totalorder %s20, 0
      %p62 = por %p60, %p61
      %p63 = scmp.ne.s32.totalorder %s51, %s52
      %p64 = scmp.eq.s32.totalorder %s21, 1
      %p65 = por %p63, %p64
      %p67 = scmp.ne.s32.totalorder %s52, %s66
      %p68 = scmp.eq.s32.totalorder %s21, 0
      %p69 = por %p67, %p68
      %s71 = sadd.s32 %s70, 1
      %p74 = scmp.eq.s32.totalorder %s15, 1
      %p75 = scmp.ne.s32.totalorder %s70, %s72
      %p76 = scmp.eq.s32.totalorder %s15, 0
      %p77 = por %p75, %p76
      %p78 = scmp.ne.s32.totalorder %s70, %s72
      %p79 = scmp.eq.s32.totalorder %s20, 1
      %p80 = por %p78, %p79
      %p81 = scmp.ne.s32.totalorder %s72, %s73
      %p82 = scmp.eq.s32.totalorder %s20, 0
      %p83 = por %p81, %p82
      %p84 = scmp.ne.s32.totalorder %s72, %s73
      %p85 = scmp.eq.s32.totalorder %s21, 1
      %p86 = por %p84, %p85
      %p88 = scmp.ne.s32.totalorder %s73, %s87
      %p89 = scmp.eq.s32.totalorder %s21, 0
      %p90 = por %p88, %p89
      %s91 = ssub.s32 %s15, %s22
      %p92 = scmp.eq.s32.totalorder %s91, 0
      %s94 = sadd.s32 %s93, 1
      %s95 = scalar_select %p92, %s93, %s94
      %p98 = pneg %p92
      %p99 = scmp.eq.s32.totalorder %s15, 1
      %p100 = por %p98, %p99
      %p101 = scmp.ne.s32.totalorder %s93, %s96
      %p102 = scmp.eq.s32.totalorder %s15, 0
      %p103 = por %p101, %p102
      %p104 = scmp.ne.s32.totalorder %s93, %s96
      %p105 = scmp.eq.s32.totalorder %s20, 1
      %p106 = por %p104, %p105
      %p107 = scmp.ne.s32.totalorder %s96, %s97
      %p108 = scmp.eq.s32.totalorder %s20, 0
      %p109 = por %p107, %p108
      %p110 = scmp.ne.s32.totalorder %s96, %s97
      %p111 = scmp.eq.s32.totalorder %s21, 1
      %p112 = por %p110, %p111
      %p114 = scmp.ne.s32.totalorder %s97, %s113
      %p115 = scmp.eq.s32.totalorder %s21, 0
      %p116 = por %p114, %p115
      %p117 = scmp.le.s32.totalorder 1, %s15
      %p118 = scmp.lt.s32.totalorder %s15, 3
      %p119 = pnand %p117, %p118
      %p120 = pneg %p119
      // Predicated region
      $region9: #{tpu_custom_call.1} parent=5 // pred_check
        _
      $region10: #{tpu_custom_call.1} parent=5 // pred_check_branch
        %122 = sbr.rel (%p119) target = $region12
      $region11: #{tpu_custom_call.1} parent=5 // pred_region
        %s123 = ssub.s32 %s15, 1
        // Predicated region
        $region13: #{tpu_custom_call.1} parent=11 // pred_check
          %p124 = pneg %p62
        $region14: #{tpu_custom_call.1} parent=11 // pred_check_branch
          %126 = sbr.rel (%p124) target = $region16
        $region15: #{tpu_custom_call.1} parent=11 // pred_region
          _
        $region16: #{tpu_custom_call.1} parent=11 // pred_fallthru
          _
        // Predicated region
        $region17: #{tpu_custom_call.1} parent=11 // pred_check
          %p127 = pneg %p83
        $region18: #{tpu_custom_call.1} parent=11 // pred_check_branch
          %129 = sbr.rel (%p127) target = $region20
        $region19: #{tpu_custom_call.1} parent=11 // pred_region
          _
        $region20: #{tpu_custom_call.1} parent=11 // pred_fallthru
          _
      $region12: #{tpu_custom_call.1} parent=5 // pred_fallthru
        _
      %p130 = scmp.lt.s32.totalorder %s15, 2
      // Predicated region
      $region21: #{tpu_custom_call.1} parent=5 // pred_check
        %p131 = pneg %p130
      $region22: #{tpu_custom_call.1} parent=5 // pred_check_branch
        %133 = sbr.rel (%p131) target = $region24
      $region23: #{tpu_custom_call.1} parent=5 // pred_region
        // Predicated region
        $region25: #{tpu_custom_call.1} parent=23 // pred_check
          %p134 = pneg %p35
        $region26: #{tpu_custom_call.1} parent=23 // pred_check_branch
          %136 = sbr.rel (%p134) target = $region28
        $region27: #{tpu_custom_call.1} parent=23 // pred_region
          %s137 = sand.u32 %s25, 1
          %s138 = scalar_lea.sflag [#allocation3], %s137
          %s139 = sand.u32 %s25, 1
          %s140 = smul.addr %s139, 8
          %s141 = scalar_lea.vmem [#allocation2], %s140
          %s143 = ssub.s32 128, 128
          %144 = vsyncadd %s138, %s143
          %s145 = smul.addr %s15, 2
          %s146 = smul.addr %s145, 64
          %s147 = scalar_lea.hbm %s0, %s146
          %s149 = sshll.u32 %s141, 4
          %s150 = int_to_ptr.vmem [resolvable:$true] %s149
          %152 = dma.hbm_to_vmem [thread:$0]  %s147, 128, %s150, %s138
        $region28: #{tpu_custom_call.1} parent=23 // pred_fallthru
          _
      $region24: #{tpu_custom_call.1} parent=5 // pred_fallthru
        _
      %p153 = scmp.le.s32.totalorder 1, %s15
      %p154 = scmp.lt.s32.totalorder %s15, 3
      %p155 = pnand %p153, %p154
      %p156 = pneg %p155
      // Predicated region
      $region29: #{tpu_custom_call.1} parent=5 // pred_check
        _
      $region30: #{tpu_custom_call.1} parent=5 // pred_check_branch
        %158 = sbr.rel (%p155) target = $region32
      $region31: #{tpu_custom_call.1} parent=5 // pred_region
        %s159 = ssub.s32 %s15, 1
        %s160 = sand.u32 %s28, 1
        %s161 = scalar_lea.sflag [#allocation3], %s160
        %s162 = sand.u32 %s28, 1
        %s163 = smul.addr %s162, 8
        %s164 = scalar_lea.vmem [#allocation2], %s163
        // Predicated region
        $region33: #{tpu_custom_call.1} parent=31 // pred_check
          %p165 = pneg %p41
        $region34: #{tpu_custom_call.1} parent=31 // pred_check_branch
          %167 = sbr.rel (%p165) target = $region36
        $region35: #{tpu_custom_call.1} parent=31 // pred_region
          %168 = dma.done %s161, 128
        $region36: #{tpu_custom_call.1} parent=31 // pred_fallthru
          _
        %s169 = sand.u32 %s28, 1
        %s170 = scalar_lea.sflag [#allocation3], %s169
        %s171 = sand.u32 %s28, 1
        %s172 = smul.addr %s171, 8
        %s173 = scalar_lea.vmem [#allocation2], %s172
        %p174 = pneg %p41
        %p175 = pneg %p38
        %p176 = pneg %p62
        %p177 = pneg %p59
        %p178 = pneg %p83
        %p179 = pneg %p80
        %p180 = pneg %p109
        %p181 = pneg %p106
        %s182 = sand.u32 %s96, 1
        %s183 = scalar_lea.sflag [#allocation4], %s182
        %s184 = sand.u32 %s96, 1
        %s185 = smul.addr %s184, 8
        %s186 = scalar_lea.vmem [#allocation5], %s185
        %v187 = vld [vmem:[%s164] sm:$0xff]
        %v189 = vcombine.high %v187, %v187
        %vm191 = vcmask 1043456
        %v192 = vsel %vm191, %v187, 0.0
        %v193 = vsel %vm191, %v189, 0.0
        %v194 = vadd.f32 %v192, %v193
        %195 = vadd.xlane.f32.xlu0 %v194
        %v196 = vpop.xlane.xlu0 %195
        %v197 = vmul.f32 %v196, 0.00390625
        %v198 = vld [vmem:[%s1] sm:$0xf]
        %v199 = vmul.f32 %v198, %v197
        %vm200 = vcmask 11264
        %v201 = vsel %vm200, %v199, 0.0
        %v202 = vrot.slane %v201, 4
        %v203 = vadd.f32 %v201, %v202
        %v204 = vrot.slane %v203, 2
        %v205 = vadd.f32 %v203, %v204
        %v206 = vrot.slane %v205, 1
        %v207 = vadd.f32 %v205, %v206
        %v208 = vmax.f32 %v207, 0.0
        %v209 = vld [vmem:[%s2] sm:$0xf]
        %v210 = vmul.f32 %v209, %v208
        %v211 = vsel %vm200, %v210, 0.0
        %212 = vadd.xlane.f32.xlu0 %v211
        %v213 = vpop.xlane.xlu0 %212
        %v214 = vxor.u32 %v213, 2147483648
        %v215 = vmul.f32 %v214, 1.442695
        %v216 = vpow.pop %v215
        %v217 = vadd.f32 %v216, 1.0
        %v218 = vrcp.pop %v217
        %v219 = vmul.f32 1.0, %v218
        %v222 = vunpack.c.l.s4 839922192
        %v223 = vunpack.c.0.s8 %v222
        %v224 = vlaneseq
        %v225 = vshrl.u32 %v224, 7
        %v226 = vsub.s32 %v223, %v225
        %v227 = vrot.slane %v219, %v226
        %v229 = vmul.f32 %v187, %v227
        %230 = vst [vmem:[%s186] sm:$0xff] %v229
        %s231 = sand.u32 %s96, 1
        %s232 = scalar_lea.sflag [#allocation4], %s231
        %s233 = sand.u32 %s96, 1
        %s234 = smul.addr %s233, 8
        %s235 = scalar_lea.vmem [#allocation5], %s234
        // Predicated region
        $region37: #{tpu_custom_call.1} parent=31 // pred_check
          %p236 = pneg %p106
        $region38: #{tpu_custom_call.1} parent=31 // pred_check_branch
          %238 = sbr.rel (%p236) target = $region40
        $region39: #{tpu_custom_call.1} parent=31 // pred_region
          %s240 = ssub.s32 128, 128
          %241 = vsyncadd %s232, %s240
          %s242 = smul.addr %s20, 2
          %s243 = smul.addr %s242, 64
          %s244 = scalar_lea.hbm %s3, %s243
          %s246 = sshll.u32 %s235, 4
          %s247 = int_to_ptr.vmem [resolvable:$true] %s246
          %249 = dma.vmem_to_hbm [thread:$0]  %s247, 128, %s244, %s232
        $region40: #{tpu_custom_call.1} parent=31 // pred_fallthru
          _
      $region32: #{tpu_custom_call.1} parent=5 // pred_fallthru
        _
      %p250 = scmp.le.s32.totalorder 2, %s15
      // Predicated region
      $region41: #{tpu_custom_call.1} parent=5 // pred_check
        %p251 = pneg %p250
      $region42: #{tpu_custom_call.1} parent=5 // pred_check_branch
        %253 = sbr.rel (%p251) target = $region44
      $region43: #{tpu_custom_call.1} parent=5 // pred_region
        %s254 = ssub.s32 %s15, 2
        // Predicated region
        $region45: #{tpu_custom_call.1} parent=43 // pred_check
          %p255 = pneg %p112
        $region46: #{tpu_custom_call.1} parent=43 // pred_check_branch
          %257 = sbr.rel (%p255) target = $region48
        $region47: #{tpu_custom_call.1} parent=43 // pred_region
          %s258 = sand.u32 %s97, 1
          %s259 = scalar_lea.sflag [#allocation4], %s258
          %s260 = sand.u32 %s97, 1
          %s261 = smul.addr %s260, 8
          %s262 = scalar_lea.vmem [#allocation5], %s261
          %263 = dma.done %s259, 128
        $region48: #{tpu_custom_call.1} parent=43 // pred_fallthru
          _
      $region44: #{tpu_custom_call.1} parent=5 // pred_fallthru
        _
    $region6: #{tpu_custom_call.1} parent=1 // loop_footer
      %s19 = sadd.s32 1, %s15
    $region7: #{tpu_custom_call.1} parent=1 // loop_footer_branch
      %14 = sbr.rel target = $region3
    $region8: #{tpu_custom_call.1} parent=1 // loop_exit
      _
    %264 = vsyncpa [#allocation3], 1
    %s265 = scalar_lea.sflag [#allocation3], 1
    %266 = vsyncpa %s265, 1
    %267 = vsyncpa [#allocation4], 1
    %s268 = scalar_lea.sflag [#allocation4], 1
    %269 = vsyncpa %s268, 1

</llo_original>
